<compile_context>
chip_gen: v6e
topology: v6e:2x2x1
jax: 0.10.0
libtpu: 0.0.40
codegen_flags: <defaults>
</compile_context>

<pallas_src>
import functools

import jax
import jax.numpy as jnp
import numpy as np
from jax.experimental import pallas as pl
from jax.experimental.pallas import tpu as pltpu


def _ohem_ce_kernel(logits_ref, labels_ref, loss_ref, stats_ref, *,
                    lb_ignore, loss_thresh):
    """Per-pixel CE + fused per-tile OHEM statistics.

    logits_ref: (C, TP)  native dtype
    labels_ref: (1, TP)  int32
    loss_ref:   (1, TP)  f32  per-pixel CE (0 for ignored pixels)
    stats_ref:  (8, 128) f32  row0=n_valid, row1=n_hard, row2=sum_hard
                              (values in lane 0, zeros elsewhere)
    """
    x = logits_ref[...].astype(jnp.float32)           # (C, TP)
    lbl = labels_ref[...]                              # (1, TP)
    valid = lbl != lb_ignore                            # (1, TP) bool

    # numerically-stable log-sum-exp over the class (sublane) axis
    m = jnp.max(x, axis=0, keepdims=True)               # (1, TP)
    lse = jnp.log(jnp.sum(jnp.exp(x - m), axis=0, keepdims=True)) + m

    # gather the logit at the label class via a one-hot mask (255 matches none)
    cls = jax.lax.broadcasted_iota(jnp.int32, x.shape, 0)    # (C, TP)
    onehot = (cls == lbl).astype(jnp.float32)                 # (C, TP)
    picked = jnp.sum(x * onehot, axis=0, keepdims=True)       # (1, TP)

    # CrossEntropyLoss(reduction='none', ignore_index=lb_ignore)
    loss = jnp.where(valid, lse - picked, 0.0)           # (1, TP) f32
    loss_ref[...] = loss

    # fused per-tile OHEM statistics (counts are exact integers <= TP in f32)
    hard = loss > loss_thresh
    n_valid = jnp.sum(valid.astype(jnp.float32), axis=1, keepdims=True)    # (1,1)
    n_hard = jnp.sum(hard.astype(jnp.float32), axis=1, keepdims=True)      # (1,1)
    sum_hard = jnp.sum(jnp.where(hard, loss, 0.0), axis=1, keepdims=True)  # (1,1)

    row = jax.lax.broadcasted_iota(jnp.int32, (8, 128), 0)
    lane = jax.lax.broadcasted_iota(jnp.int32, (8, 128), 1)
    vals = jnp.where(row == 0, n_valid,
           jnp.where(row == 1, n_hard,
           jnp.where(row == 2, sum_hard, 0.0)))
    stats_ref[...] = jnp.where(lane == 0, vals, 0.0)


def _choose_tile(hw, max_tile):
    """Pick a lane tile (multiple of 128) and the padded pixel count."""
    max_tile = max(128, (max_tile // 128) * 128)
    hw128 = ((hw + 127) // 128) * 128
    if hw128 <= max_tile:
        return hw128, hw128                      # one tile covers everything
    if hw % 128 == 0:
        # prefer a large divisor of hw -> no padding copy at all
        for t in range(max_tile, max_tile // 2, -128):
            if hw % t == 0:
                return t, hw
    # otherwise: near-max tiles with minimal padding
    n_tiles = -(-hw // max_tile)
    tile = ((-(-hw // n_tiles) + 127) // 128) * 128
    return tile, n_tiles * tile


def _per_pixel_ce(logits, labels, lb_ignore, loss_thresh, max_tile_lanes=8192):
    """Per-pixel CE loss + fused OHEM stats in a single Pallas pass.

    logits: (N, C, H, W) float (f32 or bf16), labels: (N, H, W) int.
    Returns (loss_flat (N*H*W,) f32, n_valid i32, n_hard i32, sum_hard f32).
    """
    N, C, H, W = logits.shape
    HW = H * W
    itemsize = jnp.dtype(logits.dtype).itemsize

    # Cap the logits block around ~1 MB so double-buffered inputs + outputs +
    # f32 intermediates stay well under the 16 MiB scoped-VMEM default on v5e
    # (v6e: 32 MiB / 128 MiB physical; v7x: 32 MiB / 64 MiB physical).
    budget_lanes = max(128, (1 * 1024 * 1024) // max(C * itemsize, 1))
    tile_p, hw_pad = _choose_tile(HW, min(max_tile_lanes, budget_lanes))
    num_tiles = hw_pad // tile_p

    logits3 = logits.reshape(N, C, HW)                   # free reshape (NCHW)
    labels3 = labels.reshape(N, 1, HW).astype(jnp.int32)
    if hw_pad != HW:
        pad = hw_pad - HW
        logits3 = jnp.pad(logits3, ((0, 0), (0, 0), (0, pad)))
        labels3 = jnp.pad(labels3, ((0, 0), (0, 0), (0, pad)),
                          constant_values=lb_ignore)

    kernel = functools.partial(_ohem_ce_kernel, lb_ignore=lb_ignore,
                               loss_thresh=loss_thresh)

    loss3, stats = pl.pallas_call(
        kernel,
        out_shape=(
            jax.ShapeDtypeStruct((N, 1, hw_pad), jnp.float32),
            jax.ShapeDtypeStruct((8, N * num_tiles * 128), jnp.float32),
        ),
        grid_spec=pltpu.PrefetchScalarGridSpec(
            num_scalar_prefetch=0,
            grid=(N, num_tiles),
            in_specs=[
                pl.BlockSpec((None, C, tile_p), lambda n, i: (n, 0, i)),
                pl.BlockSpec((None, 1, tile_p), lambda n, i: (n, 0, i)),
            ],
            out_specs=[
                pl.BlockSpec((None, 1, tile_p), lambda n, i: (n, 0, i)),
                pl.BlockSpec((8, 128), lambda n, i: (0, n * num_tiles + i)),
            ],
        ),
        compiler_params=pltpu.CompilerParams(
            dimension_semantics=("parallel", "parallel")),
    )(logits3, labels3)

    loss_flat = loss3[:, 0, :HW].reshape(N * HW)
    # per-tile counts are exact integers (<= tile_p) in f32; sum them in int32
    n_valid = jnp.sum(stats[0].astype(jnp.int32))
    n_hard = jnp.sum(stats[1].astype(jnp.int32))
    sum_hard = jnp.sum(stats[2])
    return loss_flat, n_valid, n_hard, sum_hard


def ohem_ce_loss(logits, labels, thresh=0.7, lb_ignore=255):
    """Forward pass of OhemCELoss. Returns a scalar float32 loss.

    logits: (N, C, H, W) float, labels: (N, H, W) int (class idx or lb_ignore).
    `thresh` / `lb_ignore` must be static Python values (as in the nn.Module).
    """
    loss_thresh = float(-np.log(np.float32(thresh)))
    N, C, H, W = logits.shape
    P = N * H * W
    k_static = max(P // 16, 1)   # static upper bound on n_min (= n_valid // 16)

    loss_flat, n_valid, n_hard, sum_hard = _per_pixel_ce(
        logits, labels, lb_ignore, loss_thresh)

    n_min = n_valid // 16

    # TODO(synk): the data-dependent top-k selection has no clean Pallas
    # equivalent; it stays in JAX glue, gated behind lax.cond so the common
    # (loss > thresh) path never pays for it.
    def _topk_mean():
        top_vals, _ = jax.lax.top_k(loss_flat, k_static)        # descending
        sel = jnp.arange(k_static, dtype=jnp.int32) < n_min
        s = jnp.sum(jnp.where(sel, top_vals, 0.0))
        return s / jnp.maximum(n_min, 1).astype(jnp.float32)

    def _hard_mean():
        # 0/0 -> nan when everything is ignored; matches torch's empty mean
        return sum_hard / n_hard.astype(jnp.float32)

    return jax.lax.cond(n_hard < n_min, _topk_mean, _hard_mean)


# ------------------------- pure-JAX / numpy references -----------------------

def _reference_per_pixel(logits, labels, lb_ignore=255):
    logp = jax.nn.log_softmax(logits.astype(jnp.float32), axis=1)
    lbl = labels.astype(jnp.int32)
    safe = jnp.where(lbl == lb_ignore, 0, lbl)
    picked = jnp.take_along_axis(logp, safe[:, None, :, :], axis=1)[:, 0]
    loss = jnp.where(lbl == lb_ignore, 0.0, -picked)
    return loss.reshape(-1)


def _reference_ohem(logits, labels, thresh=0.7, lb_ignore=255):
    loss = np.asarray(_reference_per_pixel(logits, labels, lb_ignore))
    lbl = np.asarray(labels)
    th = float(-np.log(np.float32(thresh)))
    n_min = int((lbl != lb_ignore).sum()) // 16
    hard = loss[loss > th]
    if hard.size < n_min:
        hard = np.sort(loss)[::-1][:n_min]
    return float(hard.mean()) if hard.size else float("nan")


if __name__ == "__main__":
    key = jax.random.PRNGKey(0)
    k1, k2, k3 = jax.random.split(key, 3)

    N, C, H, W = 2, 4, 16, 16
    logits = jax.random.normal(k1, (N, C, H, W), dtype=jnp.float32) * 2.0
    labels = jax.random.randint(k2, (N, H, W), 0, C, dtype=jnp.int32)
    # mark ~20% of pixels as ignored (255)
    ignore_mask = jax.random.uniform(k3, (N, H, W)) < 0.2
    labels = jnp.where(ignore_mask, 255, labels)

    loss_fn = jax.jit(ohem_ce_loss, static_argnames=("thresh", "lb_ignore"))

    # common path: plenty of pixels above the threshold -> mean of hard losses
    out_hard = jax.block_until_ready(
        loss_fn(logits, labels, thresh=0.7, lb_ignore=255))
    ref_hard = _reference_ohem(logits, labels, thresh=0.7)
    np.testing.assert_allclose(float(out_hard), ref_hard, rtol=1e-4, atol=1e-5)

    # rare path: very high loss threshold -> top-k fallback via lax.cond
    out_topk = jax.block_until_ready(
        loss_fn(logits, labels, thresh=0.001, lb_ignore=255))
    ref_topk = _reference_ohem(logits, labels, thresh=0.001)
    np.testing.assert_allclose(float(out_topk), ref_topk, rtol=1e-4, atol=1e-5)

    # per-pixel CE + fused stats vs pure-JAX reference
    th = float(-np.log(np.float32(0.7)))
    loss_px, n_valid, n_hard, sum_hard = jax.block_until_ready(
        _per_pixel_ce(logits, labels, 255, th))
    ref_px = np.asarray(_reference_per_pixel(logits, labels, 255))
    loss_px_np = np.asarray(loss_px)
    np.testing.assert_allclose(loss_px_np, ref_px, rtol=1e-5, atol=1e-5)
    assert int(n_valid) == int((np.asarray(labels) != 255).sum())
    assert int(n_hard) == int((loss_px_np > th).sum())
    np.testing.assert_allclose(float(sum_hard),
                               float(loss_px_np[loss_px_np > th].sum()),
                               rtol=1e-4, atol=1e-5)

    # bf16 logits path (halves HBM read traffic; kernel upcasts internally)
    out_bf16 = jax.block_until_ready(
        loss_fn(logits.astype(jnp.bfloat16), labels, thresh=0.7, lb_ignore=255))
    assert np.isfinite(float(out_bf16))

    print("KERNEL_OK")
</pallas_src>

<mosaic_0001>
module attributes {stable_mosaic.version = 11 : i64} {
  func.func @_ohem_ce_kernel(%arg0: i32, %arg1: i32, %arg2: memref<1x4x256xf32, #tpu.memory_space<vmem>>, %arg3: memref<1x1x256xi32, #tpu.memory_space<vmem>>, %arg4: memref<1x1x256xf32, #tpu.memory_space<vmem>>, %arg5: memref<8x128xf32, #tpu.memory_space<vmem>>) attributes {dimension_semantics = [#tpu.dimension_semantics<parallel>, #tpu.dimension_semantics<parallel>], iteration_bounds = array<i64: 2, 1>, scalar_prefetch = 0 : i64, scratch_operands = 0 : i64, tpu.core_type = #tpu.core_type<tc>, window_params = [{transform_indices = @transform_0, window_bounds = array<i64: 1, 4, 256>}, {transform_indices = @transform_1, window_bounds = array<i64: 1, 1, 256>}, {transform_indices = @transform_2, window_bounds = array<i64: 1, 1, 256>}, {transform_indices = @transform_3, window_bounds = array<i64: 8, 128>}]} {
    %c0 = arith.constant 0 : index
    %c0_0 = arith.constant 0 : index
    %c0_1 = arith.constant 0 : index
    %0 = vector.load %arg2[%c0, %c0_0, %c0_1] : memref<1x4x256xf32, #tpu.memory_space<vmem>>, vector<1x4x256xf32>
    %1 = vector.shape_cast %0 : vector<1x4x256xf32> to vector<4x256xf32>
    %c0_2 = arith.constant 0 : index
    %c0_3 = arith.constant 0 : index
    %c0_4 = arith.constant 0 : index
    %2 = vector.load %arg3[%c0_2, %c0_3, %c0_4] : memref<1x1x256xi32, #tpu.memory_space<vmem>>, vector<1x1x256xi32>
    %3 = vector.shape_cast %2 : vector<1x1x256xi32> to vector<1x256xi32>
    %c255_i32 = arith.constant 255 : i32
    %4 = vector.broadcast %c255_i32 : i32 to vector<1x256xi32>
    %5 = arith.cmpi ne, %3, %4 : vector<1x256xi32>
    %cst = arith.constant dense<0xFF800000> : vector<256xf32>
    %6 = vector.multi_reduction <maximumf>, %1, %cst [0] : vector<4x256xf32> to vector<256xf32>
    %7 = vector.shape_cast %6 : vector<256xf32> to vector<1x256xf32>
    %8 = vector.broadcast %7 : vector<1x256xf32> to vector<4x256xf32>
    %9 = arith.subf %1, %8 : vector<4x256xf32>
    %10 = math.exp %9 : vector<4x256xf32>
    %cst_5 = arith.constant dense<0.000000e+00> : vector<256xf32>
    %11 = vector.multi_reduction <add>, %10, %cst_5 [0] : vector<4x256xf32> to vector<256xf32>
    %12 = vector.shape_cast %11 : vector<256xf32> to vector<1x256xf32>
    %13 = math.log %12 : vector<1x256xf32>
    %14 = arith.addf %13, %7 : vector<1x256xf32>
    %15 = tpu.iota {dimensions = array<i32: 0>} : vector<4x256xi32>
    %16 = vector.broadcast %3 : vector<1x256xi32> to vector<4x256xi32>
    %17 = arith.cmpi eq, %15, %16 : vector<4x256xi32>
    %18 = arith.extui %17 : vector<4x256xi1> to vector<4x256xi32>
    %19 = arith.sitofp %18 : vector<4x256xi32> to vector<4x256xf32>
    %20 = arith.mulf %1, %19 : vector<4x256xf32>
    %cst_6 = arith.constant dense<0.000000e+00> : vector<256xf32>
    %21 = vector.multi_reduction <add>, %20, %cst_6 [0] : vector<4x256xf32> to vector<256xf32>
    %22 = vector.shape_cast %21 : vector<256xf32> to vector<1x256xf32>
    %23 = arith.subf %14, %22 : vector<1x256xf32>
    %cst_7 = arith.constant 0.000000e+00 : f32
    %24 = vector.broadcast %cst_7 : f32 to vector<1x256xf32>
    %25 = arith.select %5, %23, %24 : vector<1x256xi1>, vector<1x256xf32>
    %c0_8 = arith.constant 0 : index
    %c0_9 = arith.constant 0 : index
    %c0_10 = arith.constant 0 : index
    %26 = vector.load %arg4[%c0_8, %c0_9, %c0_10] : memref<1x1x256xf32, #tpu.memory_space<vmem>>, vector<1x1x256xf32>
    %27 = vector.shape_cast %26 : vector<1x1x256xf32> to vector<1x256xf32>
    %28 = vector.shape_cast %25 : vector<1x256xf32> to vector<1x1x256xf32>
    tpu.vector_store %arg4[%c0_8, %c0_9, %c0_10], %28 {strides = array<i32>} : memref<1x1x256xf32, #tpu.memory_space<vmem>>, vector<1x1x256xf32>,
    %cst_11 = arith.constant 0.356674939 : f32
    %29 = vector.broadcast %cst_11 : f32 to vector<1x256xf32>
    %30 = arith.cmpf ogt, %25, %29 : vector<1x256xf32>
    %31 = arith.extui %5 : vector<1x256xi1> to vector<1x256xi32>
    %32 = arith.sitofp %31 : vector<1x256xi32> to vector<1x256xf32>
    %cst_12 = arith.constant dense<0.000000e+00> : vector<1xf32>
    %33 = vector.multi_reduction <add>, %32, %cst_12 [1] : vector<1x256xf32> to vector<1xf32>
    %34 = vector.shape_cast %33 : vector<1xf32> to vector<1x1xf32>
    %35 = arith.extui %30 : vector<1x256xi1> to vector<1x256xi32>
    %36 = arith.sitofp %35 : vector<1x256xi32> to vector<1x256xf32>
    %cst_13 = arith.constant dense<0.000000e+00> : vector<1xf32>
    %37 = vector.multi_reduction <add>, %36, %cst_13 [1] : vector<1x256xf32> to vector<1xf32>
    %38 = vector.shape_cast %37 : vector<1xf32> to vector<1x1xf32>
    %cst_14 = arith.constant 0.000000e+00 : f32
    %39 = vector.broadcast %cst_14 : f32 to vector<1x256xf32>
    %40 = arith.select %30, %25, %39 : vector<1x256xi1>, vector<1x256xf32>
    %cst_15 = arith.constant dense<0.000000e+00> : vector<1xf32>
    %41 = vector.multi_reduction <add>, %40, %cst_15 [1] : vector<1x256xf32> to vector<1xf32>
    %42 = vector.shape_cast %41 : vector<1xf32> to vector<1x1xf32>
    %43 = tpu.iota {dimensions = array<i32: 0>} : vector<8x128xi32>
    %44 = tpu.iota {dimensions = array<i32: 1>} : vector<8x128xi32>
    %c0_i32 = arith.constant 0 : i32
    %45 = vector.broadcast %c0_i32 : i32 to vector<8x128xi32>
    %46 = arith.cmpi eq, %43, %45 : vector<8x128xi32>
    %c1_i32 = arith.constant 1 : i32
    %47 = vector.broadcast %c1_i32 : i32 to vector<8x128xi32>
    %48 = arith.cmpi eq, %43, %47 : vector<8x128xi32>
    %c2_i32 = arith.constant 2 : i32
    %49 = vector.broadcast %c2_i32 : i32 to vector<8x128xi32>
    %50 = arith.cmpi eq, %43, %49 : vector<8x128xi32>
    %cst_16 = arith.constant 0.000000e+00 : f32
    %51 = vector.shape_cast %42 : vector<1x1xf32> to vector<1x1xf32>
    %52 = vector.broadcast %51 : vector<1x1xf32> to vector<8x128xf32>
    %53 = vector.broadcast %cst_16 : f32 to vector<8x128xf32>
    %54 = arith.select %50, %52, %53 : vector<8x128xi1>, vector<8x128xf32>
    %55 = vector.shape_cast %38 : vector<1x1xf32> to vector<1x1xf32>
    %56 = vector.broadcast %55 : vector<1x1xf32> to vector<8x128xf32>
    %57 = arith.select %48, %56, %54 : vector<8x128xi1>, vector<8x128xf32>
    %58 = vector.shape_cast %34 : vector<1x1xf32> to vector<1x1xf32>
    %59 = vector.broadcast %58 : vector<1x1xf32> to vector<8x128xf32>
    %60 = arith.select %46, %59, %57 : vector<8x128xi1>, vector<8x128xf32>
    %c0_i32_17 = arith.constant 0 : i32
    %61 = vector.broadcast %c0_i32_17 : i32 to vector<8x128xi32>
    %62 = arith.cmpi eq, %44, %61 : vector<8x128xi32>
    %cst_18 = arith.constant 0.000000e+00 : f32
    %63 = vector.broadcast %cst_18 : f32 to vector<8x128xf32>
    %64 = arith.select %62, %60, %63 : vector<8x128xi1>, vector<8x128xf32>
    %c0_19 = arith.constant 0 : index
    %c0_20 = arith.constant 0 : index
    %65 = vector.load %arg5[%c0_19, %c0_20] : memref<8x128xf32, #tpu.memory_space<vmem>>, vector<8x128xf32>
    tpu.vector_store %arg5[%c0_19, %c0_20], %64 {strides = array<i32>} : memref<8x128xf32, #tpu.memory_space<vmem>>, vector<8x128xf32>,
    return
  }
  func.func @transform_0(%arg0: i32, %arg1: i32) -> (i32, i32, i32) {
    %c0_i32 = arith.constant 0 : i32
    %c0_i32_0 = arith.constant 0 : i32
    return %arg0, %c0_i32, %arg1 : i32, i32, i32
  }
  func.func @transform_1(%arg0: i32, %arg1: i32) -> (i32, i32, i32) {
    %c0_i32 = arith.constant 0 : i32
    %c0_i32_0 = arith.constant 0 : i32
    return %arg0, %c0_i32, %arg1 : i32, i32, i32
  }
  func.func @transform_2(%arg0: i32, %arg1: i32) -> (i32, i32, i32) {
    %c0_i32 = arith.constant 0 : i32
    %c0_i32_0 = arith.constant 0 : i32
    return %arg0, %c0_i32, %arg1 : i32, i32, i32
  }
  func.func @transform_3(%arg0: i32, %arg1: i32) -> (i32, i32) {
    %c1_i32 = arith.constant 1 : i32
    %0 = arith.muli %arg0, %c1_i32 : i32
    %1 = arith.addi %0, %arg1 : i32
    %c0_i32 = arith.constant 0 : i32
    %c0_i32_0 = arith.constant 0 : i32
    return %c0_i32, %1 : i32, i32
  }
}

</mosaic_0001>

<llo_original>
// kernel: ohem_ce_loss.1
$region0: #{ohem_ce_loss.1}
  #allocation0 [shape = 'u32[]', space=smem, size = 0x4, offset = 0x4, fixed_abs, tag = 'smem constant byte address 0x4 - core index']
  #allocation1 [shape = 'u32[144,128]{1,0:T(1,128)}', space=vmem, size = 0x12000, scoped, tag = 'internal scratch']
  %s0 = inlined_call_operand.vmem [shape: f32[2,4,256], index: 0, kind: input, shape index: {}]
  %s1 = inlined_call_operand.vmem [shape: s32[2,1,256], index: 1, kind: input, shape index: {}]
  %s2 = inlined_call_operand.vmem [shape: f32[2,1,256], index: 2, kind: output, shape index: {0}]
  %s3 = inlined_call_operand.vmem [shape: f32[8,256], index: 3, kind: output, shape index: {1}]
  %4 = xla_tuple %s2, %s3
  %s5 = sld [smem:[#allocation0]]
  $region49: #{ohem_ce_loss.1} parent=0
    _
  %s7 = ssub.s32 1, %s5
  %s8 = scalar_select 0, %s7, %s5
  loop: start=0, step=1, limit=4
  $region2: #{ohem_ce_loss.1} parent=0 // loop_pre_header
    _
  $region3: #{ohem_ce_loss.1} parent=0 // loop_header
    %s10 = sphi 0, %s14
    %p11 = scmp.ge.s32.totalorder %s10, 4
    %s17 = sphi 0, %s29
    %s18 = sphi 0, %s25
    %s19 = sphi 0, %s17
    %s20 = sphi 0, %s18
    %s21 = sphi 0, %s19
    %s22 = sphi 0, %s20
    %s34 = sphi 0, %s36
    %s37 = sphi 0, %s34
    %s38 = sphi 0, %s37
    %s54 = sphi 0, %s38
    %s62 = sphi 0, %s64
    %s65 = sphi 0, %s62
    %s66 = sphi 0, %s65
    %s82 = sphi 0, %s66
    %s90 = sphi 0, %s92
    %s93 = sphi 0, %s90
    %s94 = sphi 0, %s93
    %s110 = sphi 0, %s94
    %s118 = sphi 0, %s120
    %s121 = sphi 0, %s118
    %s122 = sphi 0, %s121
    %s138 = sphi 0, %s122
  $region4: #{ohem_ce_loss.1} parent=0 // loop_header_branch
    %13 = sbr.rel (%p11) target = $region8
  $region5: #{ohem_ce_loss.1} parent=0 // loop_body
    %s15 = ssub.s32 %s10, 1
    %s16 = ssub.s32 %s10, 2
    %s23 = sadd.s32 1, %s18
    %p24 = scmp.ge.s32.totalorder %s23, 1
    %s25 = scalar_select %p24, 0, %s23
    %s26 = sadd.s32 1, %s17
    %s27 = scalar_select %p24, %s26, %s17
    %p28 = scmp.ge.s32.totalorder %s27, 2
    %s29 = scalar_select %p28, 0, %s27
    %s30 = ssub.s32 %s17, %s29
    %s31 = ssub.s32 %s18, %s25
    %s32 = sor.u32 %s30, %s31
    %p33 = scmp.eq.s32.totalorder %s32, 0
    %s35 = sadd.s32 %s34, 1
    %s36 = scalar_select %p33, %s34, %s35
    %p39 = pneg %p33
    %p40 = scmp.eq.s32.totalorder %s10, 1
    %p41 = por %p39, %p40
    %p42 = scmp.ne.s32.totalorder %s34, %s37
    %p43 = scmp.eq.s32.totalorder %s10, 0
    %p44 = por %p42, %p43
    %p45 = scmp.ne.s32.totalorder %s34, %s37
    %p46 = scmp.eq.s32.totalorder %s15, 1
    %p47 = por %p45, %p46
    %p48 = scmp.ne.s32.totalorder %s37, %s38
    %p49 = scmp.eq.s32.totalorder %s15, 0
    %p50 = por %p48, %p49
    %p51 = scmp.ne.s32.totalorder %s37, %s38
    %p52 = scmp.eq.s32.totalorder %s16, 1
    %p53 = por %p51, %p52
    %p55 = scmp.ne.s32.totalorder %s38, %s54
    %p56 = scmp.eq.s32.totalorder %s16, 0
    %p57 = por %p55, %p56
    %s58 = ssub.s32 %s17, %s29
    %s59 = ssub.s32 %s18, %s25
    %s60 = sor.u32 %s58, %s59
    %p61 = scmp.eq.s32.totalorder %s60, 0
    %s63 = sadd.s32 %s62, 1
    %s64 = scalar_select %p61, %s62, %s63
    %p67 = pneg %p61
    %p68 = scmp.eq.s32.totalorder %s10, 1
    %p69 = por %p67, %p68
    %p70 = scmp.ne.s32.totalorder %s62, %s65
    %p71 = scmp.eq.s32.totalorder %s10, 0
    %p72 = por %p70, %p71
    %p73 = scmp.ne.s32.totalorder %s62, %s65
    %p74 = scmp.eq.s32.totalorder %s15, 1
    %p75 = por %p73, %p74
    %p76 = scmp.ne.s32.totalorder %s65, %s66
    %p77 = scmp.eq.s32.totalorder %s15, 0
    %p78 = por %p76, %p77
    %p79 = scmp.ne.s32.totalorder %s65, %s66
    %p80 = scmp.eq.s32.totalorder %s16, 1
    %p81 = por %p79, %p80
    %p83 = scmp.ne.s32.totalorder %s66, %s82
    %p84 = scmp.eq.s32.totalorder %s16, 0
    %p85 = por %p83, %p84
    %s86 = ssub.s32 %s17, %s29
    %s87 = ssub.s32 %s18, %s25
    %s88 = sor.u32 %s86, %s87
    %p89 = scmp.eq.s32.totalorder %s88, 0
    %s91 = sadd.s32 %s90, 1
    %s92 = scalar_select %p89, %s90, %s91
    %p95 = pneg %p89
    %p96 = scmp.eq.s32.totalorder %s10, 1
    %p97 = por %p95, %p96
    %p98 = scmp.ne.s32.totalorder %s90, %s93
    %p99 = scmp.eq.s32.totalorder %s10, 0
    %p100 = por %p98, %p99
    %p101 = scmp.ne.s32.totalorder %s90, %s93
    %p102 = scmp.eq.s32.totalorder %s15, 1
    %p103 = por %p101, %p102
    %p104 = scmp.ne.s32.totalorder %s93, %s94
    %p105 = scmp.eq.s32.totalorder %s15, 0
    %p106 = por %p104, %p105
    %p107 = scmp.ne.s32.totalorder %s93, %s94
    %p108 = scmp.eq.s32.totalorder %s16, 1
    %p109 = por %p107, %p108
    %p111 = scmp.ne.s32.totalorder %s94, %s110
    %p112 = scmp.eq.s32.totalorder %s16, 0
    %p113 = por %p111, %p112
    %s114 = sadd.s32 %s17, %s18
    %s115 = sadd.s32 %s29, %s25
    %s116 = ssub.s32 %s114, %s115
    %p117 = scmp.eq.s32.totalorder %s116, 0
    %s119 = sadd.s32 %s118, 1
    %s120 = scalar_select %p117, %s118, %s119
    %p123 = pneg %p117
    %p124 = scmp.eq.s32.totalorder %s10, 1
    %p125 = por %p123, %p124
    %p126 = scmp.ne.s32.totalorder %s118, %s121
    %p127 = scmp.eq.s32.totalorder %s10, 0
    %p128 = por %p126, %p127
    %p129 = scmp.ne.s32.totalorder %s118, %s121
    %p130 = scmp.eq.s32.totalorder %s15, 1
    %p131 = por %p129, %p130
    %p132 = scmp.ne.s32.totalorder %s121, %s122
    %p133 = scmp.eq.s32.totalorder %s15, 0
    %p134 = por %p132, %p133
    %p135 = scmp.ne.s32.totalorder %s121, %s122
    %p136 = scmp.eq.s32.totalorder %s16, 1
    %p137 = por %p135, %p136
    %p139 = scmp.ne.s32.totalorder %s122, %s138
    %p140 = scmp.eq.s32.totalorder %s16, 0
    %p141 = por %p139, %p140
    %p142 = scmp.le.s32.totalorder 1, %s10
    %p143 = scmp.lt.s32.totalorder %s10, 3
    %p144 = pnand %p142, %p143
    %p145 = pneg %p144
    // Predicated region
    $region9: #{ohem_ce_loss.1} parent=5 // pred_check
      _
    $region10: #{ohem_ce_loss.1} parent=5 // pred_check_branch
      %147 = sbr.rel (%p144) target = $region12
    $region11: #{ohem_ce_loss.1} parent=5 // pred_region
      %s148 = ssub.s32 %s10, 1
    $region12: #{ohem_ce_loss.1} parent=5 // pred_fallthru
      _
    %p149 = scmp.lt.s32.totalorder %s10, 2
    // Predicated region
    $region13: #{ohem_ce_loss.1} parent=5 // pred_check
      %p150 = pneg %p149
    $region14: #{ohem_ce_loss.1} parent=5 // pred_check_branch
      %152 = sbr.rel (%p150) target = $region16
    $region15: #{ohem_ce_loss.1} parent=5 // pred_region
      // Predicated region
      $region17: #{ohem_ce_loss.1} parent=15 // pred_check
        %p153 = pneg %p44
      $region18: #{ohem_ce_loss.1} parent=15 // pred_check_branch
        %155 = sbr.rel (%p153) target = $region20
      $region19: #{ohem_ce_loss.1} parent=15 // pred_region
        %s156 = smul.u32 2, %s18
        %p157 = scmp.lt.s32.totalorder %s17, 1
        %s158 = scalar_select %p157, %s17, 1
        %p159 = scmp.lt.s32.totalorder %s156, 1
        %s160 = scalar_select %p159, %s156, 1
        %s161 = smul.addr %s158, 2
        %s162 = sadd.s32 %s160, %s161
        %s163 = smul.addr %s162, 4
        %s164 = scalar_lea.vmem %s0, %s163
        %s165 = smul.u32 2, %s18
      $region20: #{ohem_ce_loss.1} parent=15 // pred_fallthru
        _
      // Predicated region
      $region21: #{ohem_ce_loss.1} parent=15 // pred_check
        %p166 = pneg %p72
      $region22: #{ohem_ce_loss.1} parent=15 // pred_check_branch
        %168 = sbr.rel (%p166) target = $region24
      $region23: #{ohem_ce_loss.1} parent=15 // pred_region
        %s169 = smul.u32 2, %s18
        %p170 = scmp.lt.s32.totalorder %s17, 1
        %s171 = scalar_select %p170, %s17, 1
        %p172 = scmp.lt.s32.totalorder %s169, 1
        %s173 = scalar_select %p172, %s169, 1
        %s174 = smul.addr %s171, 2
        %s175 = sadd.s32 %s173, %s174
        %s176 = scalar_lea.vmem %s1, %s175
        %s177 = smul.u32 2, %s18
      $region24: #{ohem_ce_loss.1} parent=15 // pred_fallthru
        _
    $region16: #{ohem_ce_loss.1} parent=5 // pred_fallthru
      _
    %p178 = scmp.le.s32.totalorder 1, %s10
    %p179 = scmp.lt.s32.totalorder %s10, 3
    %p180 = pnand %p178, %p179
    %p181 = pneg %p180
    // Predicated region
    $region25: #{ohem_ce_loss.1} parent=5 // pred_check
      _
    $region26: #{ohem_ce_loss.1} parent=5 // pred_check_branch
      %183 = sbr.rel (%p180) target = $region28
    $region27: #{ohem_ce_loss.1} parent=5 // pred_region
      %s184 = ssub.s32 %s10, 1
      %s185 = smul.u32 2, %s20
      %p186 = scmp.lt.s32.totalorder %s19, 1
      %s187 = scalar_select %p186, %s19, 1
      %p188 = scmp.lt.s32.totalorder %s185, 1
      %s189 = scalar_select %p188, %s185, 1
      %s190 = smul.addr %s187, 2
      %s191 = sadd.s32 %s189, %s190
      %s192 = smul.addr %s191, 4
      %s193 = scalar_lea.vmem %s0, %s192
      %p194 = pneg %p50
      %p195 = pneg %p47
      %s196 = smul.u32 2, %s20
      %p197 = scmp.lt.s32.totalorder %s19, 1
      %s198 = scalar_select %p197, %s19, 1
      %p199 = scmp.lt.s32.totalorder %s196, 1
      %s200 = scalar_select %p199, %s196, 1
      %s201 = smul.addr %s198, 2
      %s202 = sadd.s32 %s200, %s201
      %s203 = scalar_lea.vmem %s1, %s202
      %p204 = pneg %p78
      %p205 = pneg %p75
      %p206 = pneg %p106
      %p207 = pneg %p103
      %s208 = smul.u32 2, %s20
      %p209 = scmp.lt.s32.totalorder %s19, 1
      %s210 = scalar_select %p209, %s19, 1
      %p211 = scmp.lt.s32.totalorder %s208, 1
      %s212 = scalar_select %p211, %s208, 1
      %s213 = smul.addr %s210, 2
      %s214 = sadd.s32 %s212, %s213
      %s215 = scalar_lea.vmem %s2, %s214
      %p216 = pneg %p134
      %p217 = pneg %p131
      %s218 = sadd.s32 %s19, %s20
      %p219 = scmp.lt.s32.totalorder %s218, 1
      %s220 = scalar_select %p219, %s218, 1
      %s221 = smul.addr %s220, 8
      %s222 = scalar_lea.vmem %s3, %s221
      %s223 = smul.u32 2, %s20
      %p224 = scmp.lt.s32.totalorder %s19, 1
      %s225 = scalar_select %p224, %s19, 1
      %p226 = scmp.lt.s32.totalorder %s223, 1
      %s227 = scalar_select %p226, %s223, 1
      %s228 = smul.addr %s225, 2
      %s229 = sadd.s32 %s227, %s228
      %s230 = smul.addr %s229, 4
      %s231 = scalar_lea.vmem %s0, %s230
      %s232 = smul.u32 2, %s20
      %s233 = smul.u32 2, %s20
      %p234 = scmp.lt.s32.totalorder %s19, 1
      %s235 = scalar_select %p234, %s19, 1
      %p236 = scmp.lt.s32.totalorder %s233, 1
      %s237 = scalar_select %p236, %s233, 1
      %s238 = smul.addr %s235, 2
      %s239 = sadd.s32 %s237, %s238
      %s240 = scalar_lea.vmem %s1, %s239
      %s241 = smul.u32 2, %s20
      %s242 = smul.u32 2, %s20
      %p243 = scmp.lt.s32.totalorder %s19, 1
      %s244 = scalar_select %p243, %s19, 1
      %p245 = scmp.lt.s32.totalorder %s242, 1
      %s246 = scalar_select %p245, %s242, 1
      %s247 = smul.addr %s244, 2
      %s248 = sadd.s32 %s246, %s247
      %s249 = scalar_lea.vmem %s2, %s248
      %s250 = smul.u32 2, %s20
      %s251 = sadd.s32 %s19, %s20
      %p252 = scmp.lt.s32.totalorder %s251, 1
      %s253 = scalar_select %p252, %s251, 1
      %s254 = smul.addr %s253, 8
      %s255 = scalar_lea.vmem %s3, %s254
      %s256 = sadd.s32 %s19, %s20
      %v257 = vld [vmem:[%s231] sm:$0xff]
      %v258 = vld [vmem:[%s240] sm:$0x3]
      %vm259 = vcmp.ne.s32.totalorder %v258, 255
      %v261 = vcombine.high %v257, %v257
      %vm263 = vcmask 1043456
      %v264 = vsel %vm263, %v257, -inf
      %v265 = vrot.slane %v264, 4
      %v266 = vmax.f32 %v264, %v265
      %v267 = vrot.slane %v266, 2
      %v268 = vmax.f32 %v266, %v267
      %v269 = vrot.slane %v268, 1
      %v270 = vmax.f32 %v268, %v269
      %v271 = vsel %vm263, %v261, -inf
      %v272 = vrot.slane %v271, 4
      %v273 = vmax.f32 %v271, %v272
      %v274 = vrot.slane %v273, 2
      %v275 = vmax.f32 %v273, %v274
      %v276 = vrot.slane %v275, 1
      %v277 = vmax.f32 %v275, %v276
      %v280 = vcombine.low %v270, %v277
      %v282 = vsub.f32 %v257, %v280
      %v283 = vmul.f32 %v282, 1.442695
      %v284 = vpow.pop %v283
      %v286 = vcombine.high %v284, %v284
      %v288 = vsel %vm263, %v284, 0.0
      %v289 = vrot.slane %v288, 4
      %v290 = vadd.f32 %v288, %v289
      %v291 = vrot.slane %v290, 2
      %v292 = vadd.f32 %v290, %v291
      %v293 = vrot.slane %v292, 1
      %v294 = vadd.f32 %v292, %v293
      %v295 = vsel %vm263, %v286, 0.0
      %v296 = vrot.slane %v295, 4
      %v297 = vadd.f32 %v295, %v296
      %v298 = vrot.slane %v297, 2
      %v299 = vadd.f32 %v297, %v298
      %v300 = vrot.slane %v299, 1
      %v301 = vadd.f32 %v299, %v300
      %v302 = vlog2.pop %v294
      %v303 = vmul.f32 %v302, 0.6931472
      %v304 = vlog2.pop %v301
      %v305 = vmul.f32 %v304, 0.6931472
      %v306 = vadd.f32 %v303, %v270
      %v307 = vadd.f32 %v305, %v277
      %v308 = vlaneseq
      %v309 = vshrl.u32 %v308, 7
      %v310 = vlaneseq
      %v311 = vshrl.u32 %v310, 7
      %v312 = vsub.s32 0, %v311
      %v313 = vrot.slane %v258, %v312
      %v314 = vlaneseq
      %v315 = vshrl.u32 %v314, 7
      %v316 = vsub.s32 1, %v315
      %v317 = vrot.slane %v258, %v316
      %vm318 = vcmp.eq.s32.totalorder %v309, %v313
      %vm319 = vcmp.eq.s32.totalorder %v309, %v317
      %v320 = vsel %vm318, 1, 0
      %v321 = vsel %vm319, 1, 0
      %v322 = vcvt.s32.f32 %v320
      %v323 = vcvt.s32.f32 %v321
      %v326 = vcombine.low %v322, %v323
      %v328 = vmul.f32 %v257, %v326
      %v330 = vcombine.high %v328, %v328
      %v332 = vsel %vm263, %v328, 0.0
      %v333 = vrot.slane %v332, 4
      %v334 = vadd.f32 %v332, %v333
      %v335 = vrot.slane %v334, 2
      %v336 = vadd.f32 %v334, %v335
      %v337 = vrot.slane %v336, 1
      %v338 = vadd.f32 %v336, %v337
      %v339 = vsel %vm263, %v330, 0.0
      %v340 = vrot.slane %v339, 4
      %v341 = vadd.f32 %v339, %v340
      %v342 = vrot.slane %v341, 2
      %v343 = vadd.f32 %v341, %v342
      %v344 = vrot.slane %v343, 1
      %v345 = vadd.f32 %v343, %v344
      %v346 = vsub.f32 %v306, %v338
      %v347 = vsub.f32 %v307, %v345
      %v350 = vcombine.low %v346, %v347
      %v352 = vunpack.c.l.s4 1966171168
      %v353 = vunpack.c.0.s8 %v352
      %v354 = vlaneseq
      %v355 = vshrl.u32 %v354, 7
      %v356 = vsub.s32 %v353, %v355
      %v357 = vrot.slane %v350, %v356
      %v359 = vunpack.c.l.s4 1966171168
      %v360 = vunpack.c.0.s8 %v359
      %v361 = vlaneseq
      %v362 = vshrl.u32 %v361, 7
      %v363 = vsub.s32 %v360, %v362
      %v364 = vrot.slane %v357, %v363
      %v366 = vsel %vm259, %v364, 0.0
      %v367 = vlaneseq
      %vm368 = vcmp.ge.s32.totalorder %v367, 0
      %vm369 = vcmp.lt.s32.totalorder %v367, 256
      %vm370 = vmand %vm368, %vm369
      %371 = vst.msk [vmem:[%s249] sm:$0x3] %vm370, %v366
      %vm372 = vcmp.gt.f32.partialorder %v366, 0.35667494
      %v373 = vsel %vm259, 1, 0
      %v374 = vcvt.s32.f32 %v373
      %v376 = vlaneseq
      %v377 = vshrl.u32 %v376, 7
      %v378 = vsub.s32 0, %v377
      %v379 = vrot.slane %v374, %v378
      %v380 = vlaneseq
      %v381 = vshrl.u32 %v380, 7
      %v382 = vsub.s32 1, %v381
      %v383 = vrot.slane %v374, %v382
      %vm386 = vcmask 1040384
      %v387 = vsel %vm386, %v379, 0.0
      %v388 = vsel %vm386, %v383, 0.0
      %v389 = vadd.f32 %v387, %v388
      %390 = vadd.xlane.f32.xlu0 %v389
      %v391 = vpop.xlane.xlu0 %390
      %v392 = vsel %vm372, 1, 0
      %v393 = vcvt.s32.f32 %v392
      %v395 = vlaneseq
      %v396 = vshrl.u32 %v395, 7
      %v397 = vsub.s32 0, %v396
      %v398 = vrot.slane %v393, %v397
      %v399 = vlaneseq
      %v400 = vshrl.u32 %v399, 7
      %v401 = vsub.s32 1, %v400
      %v402 = vrot.slane %v393, %v401
      %v405 = vsel %vm386, %v398, 0.0
      %v406 = vsel %vm386, %v402, 0.0
      %v407 = vadd.f32 %v405, %v406
      %408 = vadd.xlane.f32.xlu0 %v407
      %v409 = vpop.xlane.xlu0 %408
      %v410 = vsel %vm372, %v366, 0.0
      %v412 = vlaneseq
      %v413 = vshrl.u32 %v412, 7
      %v414 = vsub.s32 0, %v413
      %v415 = vrot.slane %v410, %v414
      %v416 = vlaneseq
      %v417 = vshrl.u32 %v416, 7
      %v418 = vsub.s32 1, %v417
      %v419 = vrot.slane %v410, %v418
      %v422 = vsel %vm386, %v415, 0.0
      %v423 = vsel %vm386, %v419, 0.0
      %v424 = vadd.f32 %v422, %v423
      %425 = vadd.xlane.f32.xlu0 %v424
      %v426 = vpop.xlane.xlu0 %425
      %v427 = vlaneseq
      %v428 = vand.u32 %v427, 127
      %vm429 = vcmp.eq.s32.totalorder %v309, 0
      %vm430 = vcmp.eq.s32.totalorder %v309, 1
      %vm431 = vcmp.eq.s32.totalorder %v309, 2
      %v432 = vlaneseq
      %v433 = vshrl.u32 %v432, 7
      %v434 = vsub.s32 0, %v433
      %v435 = vrot.slane %v426, %v434
      %v436 = vsel %vm431, %v435, 0.0
      %v437 = vlaneseq
      %v438 = vshrl.u32 %v437, 7
      %v439 = vsub.s32 0, %v438
      %v440 = vrot.slane %v409, %v439
      %v441 = vsel %vm430, %v440, %v436
      %v442 = vlaneseq
      %v443 = vshrl.u32 %v442, 7
      %v444 = vsub.s32 0, %v443
      %v445 = vrot.slane %v391, %v444
      %v446 = vsel %vm429, %v445, %v441
      %vm447 = vcmp.eq.s32.totalorder %v428, 0
      %v448 = vsel %vm447, %v446, 0.0
      %449 = vst [vmem:[%s255] sm:$0xff] %v448
      %s450 = smul.u32 2, %s20
      %p451 = scmp.lt.s32.totalorder %s19, 1
      %s452 = scalar_select %p451, %s19, 1
      %p453 = scmp.lt.s32.totalorder %s450, 1
      %s454 = scalar_select %p453, %s450, 1
      %s455 = smul.addr %s452, 2
      %s456 = sadd.s32 %s454, %s455
      %s457 = scalar_lea.vmem %s2, %s456
      %s458 = sadd.s32 %s19, %s20
      %p459 = scmp.lt.s32.totalorder %s458, 1
      %s460 = scalar_select %p459, %s458, 1
      %s461 = smul.addr %s460, 8
      %s462 = scalar_lea.vmem %s3, %s461
      // Predicated region
      $region29: #{ohem_ce_loss.1} parent=27 // pred_check
        %p463 = pneg %p103
      $region30: #{ohem_ce_loss.1} parent=27 // pred_check_branch
        %465 = sbr.rel (%p463) target = $region32
      $region31: #{ohem_ce_loss.1} parent=27 // pred_region
        %s466 = smul.u32 2, %s20
      $region32: #{ohem_ce_loss.1} parent=27 // pred_fallthru
        _
      // Predicated region
      $region33: #{ohem_ce_loss.1} parent=27 // pred_check
        %p467 = pneg %p131
      $region34: #{ohem_ce_loss.1} parent=27 // pred_check_branch
        %469 = sbr.rel (%p467) target = $region36
      $region35: #{ohem_ce_loss.1} parent=27 // pred_region
        %s470 = sadd.s32 %s19, %s20
      $region36: #{ohem_ce_loss.1} parent=27 // pred_fallthru
        _
    $region28: #{ohem_ce_loss.1} parent=5 // pred_fallthru
      _
    %p471 = scmp.le.s32.totalorder 2, %s10
    // Predicated region
    $region37: #{ohem_ce_loss.1} parent=5 // pred_check
      %p472 = pneg %p471
    $region38: #{ohem_ce_loss.1} parent=5 // pred_check_branch
      %474 = sbr.rel (%p472) target = $region40
    $region39: #{ohem_ce_loss.1} parent=5 // pred_region
      %s475 = ssub.s32 %s10, 2
      // Predicated region
      $region41: #{ohem_ce_loss.1} parent=39 // pred_check
        %p476 = pneg %p109
      $region42: #{ohem_ce_loss.1} parent=39 // pred_check_branch
        %478 = sbr.rel (%p476) target = $region44
      $region43: #{ohem_ce_loss.1} parent=39 // pred_region
        %s479 = smul.u32 2, %s22
        %p480 = scmp.lt.s32.totalorder %s21, 1
        %s481 = scalar_select %p480, %s21, 1
        %p482 = scmp.lt.s32.totalorder %s479, 1
        %s483 = scalar_select %p482, %s479, 1
        %s484 = smul.addr %s481, 2
        %s485 = sadd.s32 %s483, %s484
        %s486 = scalar_lea.vmem %s2, %s485
      $region44: #{ohem_ce_loss.1} parent=39 // pred_fallthru
        _
      // Predicated region
      $region45: #{ohem_ce_loss.1} parent=39 // pred_check
        %p487 = pneg %p137
      $region46: #{ohem_ce_loss.1} parent=39 // pred_check_branch
        %489 = sbr.rel (%p487) target = $region48
      $region47: #{ohem_ce_loss.1} parent=39 // pred_region
        %s490 = sadd.s32 %s21, %s22
        %p491 = scmp.lt.s32.totalorder %s490, 1
        %s492 = scalar_select %p491, %s490, 1
        %s493 = smul.addr %s492, 8
        %s494 = scalar_lea.vmem %s3, %s493
      $region48: #{ohem_ce_loss.1} parent=39 // pred_fallthru
        _
    $region40: #{ohem_ce_loss.1} parent=5 // pred_fallthru
      _
  $region6: #{ohem_ce_loss.1} parent=0 // loop_footer
    %s14 = sadd.s32 1, %s10
  $region7: #{ohem_ce_loss.1} parent=0 // loop_footer_branch
    %9 = sbr.rel target = $region3
  $region8: #{ohem_ce_loss.1} parent=0 // loop_exit
    _

</llo_original>
